<compile_context>
chip_gen: v6e
topology: v6e:2x2x1
jax: 0.10.0
libtpu: 0.0.40
codegen_flags: <defaults>
</compile_context>

<pallas_src>
import jax
import jax.numpy as jnp
from jax import lax
from jax.experimental import pallas as pl
from jax.experimental.pallas import tpu as pltpu

_LANE = 128
# Pad value for both pred and gt.  For a padded index k and any realistic value x:
#   (x - PAD) * (PAD - y) < 0,  (PAD - x) * (y - PAD) < 0,  (PAD - PAD)*(PAD - PAD) = 0
# so every pairwise term involving a padded index is clipped to exactly 0 by the
# ReLU -> no in-kernel masking needed anywhere.
_PAD_VALUE = 1e18


def _make_kernel(IT, JT):
    """One (n, i-block) grid step: IT i sub-tiles x JT j sub-tiles of 128x128
    pairwise work, accumulated into a register-resident (8, 128) carry."""
    j_unroll = True if JT <= 8 else 8

    def kernel(prow_ref, grow_ref, pcol_ref, gcol_ref, out_ref):
        def i_body(it, acc):
            ioff = pl.multiple_of(it * _LANE, _LANE)
            p_col = pcol_ref[pl.ds(ioff, _LANE), :]            # (128, 1)
            g_col = gcol_ref[pl.ds(ioff, _LANE), :]            # (128, 1)
            # Hoisted lane-broadcasts, reused by every j sub-tile below.
            p_col_b = jnp.broadcast_to(p_col, (_LANE, _LANE))  # (128, 128)
            g_col_b = jnp.broadcast_to(g_col, (_LANE, _LANE))  # (128, 128)

            def j_body(jt, acc):
                joff = pl.multiple_of(jt * _LANE, _LANE)
                p_row = prow_ref[:, pl.ds(joff, _LANE)]        # (1, 128)
                g_row = grow_ref[:, pl.ds(joff, _LANE)]        # (1, 128)
                # pw[i, j] = relu((p_i - p_j) * (g_j - g_i)); i on sublanes, j on lanes.
                pw = jnp.maximum((p_col_b - p_row) * (g_row - g_col_b), 0.0)
                # Fold the 16 sublane vreg-rows into the accumulator: 16 plain
                # VPU adds, no MXU dot, no cross-sublane XLU reduce.
                part = pw[0:8, :]
                for k in range(1, _LANE // 8):
                    part = part + pw[8 * k:8 * (k + 1), :]
                return acc + part

            return lax.fori_loop(0, JT, j_body, acc, unroll=j_unroll)

        acc = lax.fori_loop(0, IT, i_body,
                            jnp.zeros((8, _LANE), jnp.float32), unroll=True)
        out_ref[...] = acc          # single lane-dense (8, 128) store per step

    return kernel


def ranking_mse_loss_pallas(prediction, ground_truth, alpha=0.5):
    """Pallas TPU equivalent of Loss.forward(prediction, ground_truth, alpha)."""
    N, V = ground_truth.shape
    pred = jnp.asarray(prediction, jnp.float32).reshape(N, V)
    gt = jnp.asarray(ground_truth, jnp.float32).reshape(N, V)

    Vp = max(_LANE, ((V + _LANE - 1) // _LANE) * _LANE)
    pad = Vp - V
    if pad:
        predp = jnp.pad(pred, ((0, 0), (0, pad)), constant_values=_PAD_VALUE)
        gtp = jnp.pad(gt, ((0, 0), (0, pad)), constant_values=_PAD_VALUE)
    else:
        predp, gtp = pred, gt

    n_sub = Vp // _LANE                     # number of 128-wide sub-tiles along V
    # Pick IT (i sub-tiles per grid step): largest divisor of n_sub (<= 8) that
    # still leaves >= 4 parallel (n, ib) blocks for v7x megacore; otherwise the
    # largest divisor (amortize step overhead on single-TC chips).
    divisors = [c for c in (8, 4, 2, 1) if n_sub % c == 0]
    IT = divisors[0]
    for c in divisors:
        if N * (n_sub // c) >= 4:
            IT = c
            break
    TIB = IT * _LANE
    IB = n_sub // IT
    JT = n_sub

    # Row (j on lanes) and column (i on sublanes) layouts of the same padded data.
    pred_row = predp.reshape(N, 1, Vp)
    gt_row = gtp.reshape(N, 1, Vp)
    pred_col = predp.reshape(N, Vp, 1)
    gt_col = gtp.reshape(N, Vp, 1)

    kernel = _make_kernel(IT, JT)

    partials = pl.pallas_call(
        kernel,
        out_shape=jax.ShapeDtypeStruct((N, IB, 8, _LANE), jnp.float32),
        grid_spec=pltpu.PrefetchScalarGridSpec(
            num_scalar_prefetch=0,
            grid=(N, IB),
            in_specs=[
                pl.BlockSpec((None, 1, Vp), lambda n, ib: (n, 0, 0)),    # pred rows
                pl.BlockSpec((None, 1, Vp), lambda n, ib: (n, 0, 0)),    # gt rows
                pl.BlockSpec((None, TIB, 1), lambda n, ib: (n, ib, 0)),  # pred cols
                pl.BlockSpec((None, TIB, 1), lambda n, ib: (n, ib, 0)),  # gt cols
            ],
            out_specs=pl.BlockSpec((None, None, 8, _LANE),
                                   lambda n, ib: (n, ib, 0, 0)),
        ),
        compiler_params=pltpu.CompilerParams(
            dimension_semantics=("parallel", "parallel"),
        ),
    )(pred_row, gt_row, pred_col, gt_col)

    # Padded pairs contribute exactly 0, so the plain sum over all partials is the
    # sum over valid (i, j) pairs.  MSE + all normalizations done here (O(N*V)).
    loss2 = jnp.sum(partials) / jnp.float32(N * V * V)
    loss1 = jnp.mean((pred - gt) ** 2)
    return loss1 + jnp.float32(alpha) * loss2


def _reference_loss(prediction, ground_truth, alpha=0.5):
    """Pure-JAX reference mirroring the PyTorch module."""
    N, V = ground_truth.shape
    pred = jnp.asarray(prediction, jnp.float32).reshape(N, V)
    gt = jnp.asarray(ground_truth, jnp.float32).reshape(N, V)
    pred_pw = pred[:, :, None] - pred[:, None, :]     # pred_i - pred_j
    gt_pw = gt[:, None, :] - gt[:, :, None]           # gt_j - gt_i
    loss2 = jnp.mean(jax.nn.relu(pred_pw * gt_pw))
    loss1 = jnp.mean((pred - gt) ** 2)
    return loss1 + alpha * loss2


def ranking_mse_loss(prediction, ground_truth, alpha=0.5):
    """Dispatcher: below ~1M pairwise terms the fused XLA path beats the kernel
    launch + grid overhead; above it the Pallas kernel wins."""
    N, V = ground_truth.shape
    if N * V * V < (1 << 20):
        return _reference_loss(prediction, ground_truth, alpha)
    return ranking_mse_loss_pallas(prediction, ground_truth, alpha)


if __name__ == "__main__":
    key = jax.random.PRNGKey(0)
    # (2, 16)  : single padded tile (heavy padding, Vp=128)
    # (3, 200) : padded multi-tile, IT=1
    # (2, 256) : unpadded, IT=1, IB=2
    # (2, 512) : unpadded, IT=2, JT=4 (multi i/j sub-tiles per step)
    cases = [(2, 16), (3, 200), (2, 256), (2, 512)]
    for idx, (N, V) in enumerate(cases):
        k1, k2 = jax.random.split(jax.random.fold_in(key, idx))
        prediction = jax.random.normal(k1, (N, V), dtype=jnp.float32)
        ground_truth = jax.random.normal(k2, (N, V), dtype=jnp.float32)

        loss = ranking_mse_loss_pallas(prediction, ground_truth, alpha=0.5)
        jax.block_until_ready(loss)

        ref = _reference_loss(prediction, ground_truth, alpha=0.5)
        assert jnp.allclose(loss, ref, rtol=1e-4, atol=1e-5), (N, V, float(loss), float(ref))

    # Exercise the public dispatcher once (small shape -> fused XLA path).
    _ = jax.block_until_ready(ranking_mse_loss(prediction, ground_truth, alpha=0.5))

    print("KERNEL_OK")
</pallas_src>

<mosaic_0001>
module attributes {stable_mosaic.version = 11 : i64} {
  func.func @kernel(%arg0: i32, %arg1: i32, %arg2: memref<1x1x128xf32, #tpu.memory_space<vmem>>, %arg3: memref<1x1x128xf32, #tpu.memory_space<vmem>>, %arg4: memref<1x128x1xf32, #tpu.memory_space<vmem>>, %arg5: memref<1x128x1xf32, #tpu.memory_space<vmem>>, %arg6: memref<1x1x8x128xf32, #tpu.memory_space<vmem>>) attributes {dimension_semantics = [#tpu.dimension_semantics<parallel>, #tpu.dimension_semantics<parallel>], iteration_bounds = array<i64: 2, 1>, scalar_prefetch = 0 : i64, scratch_operands = 0 : i64, tpu.core_type = #tpu.core_type<tc>, window_params = [{transform_indices = @transform_0, window_bounds = array<i64: 1, 1, 128>}, {transform_indices = @transform_1, window_bounds = array<i64: 1, 1, 128>}, {transform_indices = @transform_2, window_bounds = array<i64: 1, 128, 1>}, {transform_indices = @transform_3, window_bounds = array<i64: 1, 128, 1>}, {transform_indices = @transform_4, window_bounds = array<i64: 1, 1, 8, 128>}]} {
    %cst = arith.constant 0.000000e+00 : f32
    %0 = vector.broadcast %cst : f32 to vector<8x128xf32>
    %c0_i32 = arith.constant 0 : i32
    %c128_i32 = arith.constant 128 : i32
    %1 = arith.muli %c0_i32, %c128_i32 : i32
    %2 = tpu.assume_multiple %1, 128 : i32
    %c0 = arith.constant 0 : index
    %3 = arith.index_cast %2 : i32 to index
    %c0_0 = arith.constant 0 : index
    %4 = vector.load %arg4[%c0, %3, %c0_0] : memref<1x128x1xf32, #tpu.memory_space<vmem>>, vector<1x128x1xf32>
    %5 = vector.shape_cast %4 : vector<1x128x1xf32> to vector<128x1xf32>
    %c0_1 = arith.constant 0 : index
    %6 = arith.index_cast %2 : i32 to index
    %c0_2 = arith.constant 0 : index
    %7 = vector.load %arg5[%c0_1, %6, %c0_2] : memref<1x128x1xf32, #tpu.memory_space<vmem>>, vector<1x128x1xf32>
    %8 = vector.shape_cast %7 : vector<1x128x1xf32> to vector<128x1xf32>
    %9 = vector.shape_cast %5 : vector<128x1xf32> to vector<128x1xf32>
    %10 = vector.broadcast %9 : vector<128x1xf32> to vector<128x128xf32>
    %11 = vector.shape_cast %8 : vector<128x1xf32> to vector<128x1xf32>
    %12 = vector.broadcast %11 : vector<128x1xf32> to vector<128x128xf32>
    %c0_i32_3 = arith.constant 0 : i32
    %c128_i32_4 = arith.constant 128 : i32
    %13 = arith.muli %c0_i32_3, %c128_i32_4 : i32
    %14 = tpu.assume_multiple %13, 128 : i32
    %c0_5 = arith.constant 0 : index
    %c0_6 = arith.constant 0 : index
    %15 = arith.index_cast %14 : i32 to index
    %16 = vector.load %arg2[%c0_5, %c0_6, %15] : memref<1x1x128xf32, #tpu.memory_space<vmem>>, vector<1x1x128xf32>
    %17 = vector.shape_cast %16 : vector<1x1x128xf32> to vector<1x128xf32>
    %c0_7 = arith.constant 0 : index
    %c0_8 = arith.constant 0 : index
    %18 = arith.index_cast %14 : i32 to index
    %19 = vector.load %arg3[%c0_7, %c0_8, %18] : memref<1x1x128xf32, #tpu.memory_space<vmem>>, vector<1x1x128xf32>
    %20 = vector.shape_cast %19 : vector<1x1x128xf32> to vector<1x128xf32>
    %21 = vector.broadcast %17 : vector<1x128xf32> to vector<128x128xf32>
    %22 = arith.subf %10, %21 : vector<128x128xf32>
    %23 = vector.broadcast %20 : vector<1x128xf32> to vector<128x128xf32>
    %24 = arith.subf %23, %12 : vector<128x128xf32>
    %25 = arith.mulf %22, %24 : vector<128x128xf32>
    %cst_9 = arith.constant 0.000000e+00 : f32
    %26 = vector.broadcast %cst_9 : f32 to vector<128x128xf32>
    %27 = arith.maximumf %25, %26 : vector<128x128xf32>
    %28 = vector.extract_strided_slice %27 {offsets = [0, 0], sizes = [8, 128], strides = [1, 1]} : vector<128x128xf32> to vector<8x128xf32>
    %29 = vector.extract_strided_slice %27 {offsets = [8, 0], sizes = [8, 128], strides = [1, 1]} : vector<128x128xf32> to vector<8x128xf32>
    %30 = arith.addf %28, %29 : vector<8x128xf32>
    %31 = vector.extract_strided_slice %27 {offsets = [16, 0], sizes = [8, 128], strides = [1, 1]} : vector<128x128xf32> to vector<8x128xf32>
    %32 = arith.addf %30, %31 : vector<8x128xf32>
    %33 = vector.extract_strided_slice %27 {offsets = [24, 0], sizes = [8, 128], strides = [1, 1]} : vector<128x128xf32> to vector<8x128xf32>
    %34 = arith.addf %32, %33 : vector<8x128xf32>
    %35 = vector.extract_strided_slice %27 {offsets = [32, 0], sizes = [8, 128], strides = [1, 1]} : vector<128x128xf32> to vector<8x128xf32>
    %36 = arith.addf %34, %35 : vector<8x128xf32>
    %37 = vector.extract_strided_slice %27 {offsets = [40, 0], sizes = [8, 128], strides = [1, 1]} : vector<128x128xf32> to vector<8x128xf32>
    %38 = arith.addf %36, %37 : vector<8x128xf32>
    %39 = vector.extract_strided_slice %27 {offsets = [48, 0], sizes = [8, 128], strides = [1, 1]} : vector<128x128xf32> to vector<8x128xf32>
    %40 = arith.addf %38, %39 : vector<8x128xf32>
    %41 = vector.extract_strided_slice %27 {offsets = [56, 0], sizes = [8, 128], strides = [1, 1]} : vector<128x128xf32> to vector<8x128xf32>
    %42 = arith.addf %40, %41 : vector<8x128xf32>
    %43 = vector.extract_strided_slice %27 {offsets = [64, 0], sizes = [8, 128], strides = [1, 1]} : vector<128x128xf32> to vector<8x128xf32>
    %44 = arith.addf %42, %43 : vector<8x128xf32>
    %45 = vector.extract_strided_slice %27 {offsets = [72, 0], sizes = [8, 128], strides = [1, 1]} : vector<128x128xf32> to vector<8x128xf32>
    %46 = arith.addf %44, %45 : vector<8x128xf32>
    %47 = vector.extract_strided_slice %27 {offsets = [80, 0], sizes = [8, 128], strides = [1, 1]} : vector<128x128xf32> to vector<8x128xf32>
    %48 = arith.addf %46, %47 : vector<8x128xf32>
    %49 = vector.extract_strided_slice %27 {offsets = [88, 0], sizes = [8, 128], strides = [1, 1]} : vector<128x128xf32> to vector<8x128xf32>
    %50 = arith.addf %48, %49 : vector<8x128xf32>
    %51 = vector.extract_strided_slice %27 {offsets = [96, 0], sizes = [8, 128], strides = [1, 1]} : vector<128x128xf32> to vector<8x128xf32>
    %52 = arith.addf %50, %51 : vector<8x128xf32>
    %53 = vector.extract_strided_slice %27 {offsets = [104, 0], sizes = [8, 128], strides = [1, 1]} : vector<128x128xf32> to vector<8x128xf32>
    %54 = arith.addf %52, %53 : vector<8x128xf32>
    %55 = vector.extract_strided_slice %27 {offsets = [112, 0], sizes = [8, 128], strides = [1, 1]} : vector<128x128xf32> to vector<8x128xf32>
    %56 = arith.addf %54, %55 : vector<8x128xf32>
    %57 = vector.extract_strided_slice %27 {offsets = [120, 0], sizes = [8, 128], strides = [1, 1]} : vector<128x128xf32> to vector<8x128xf32>
    %58 = arith.addf %56, %57 : vector<8x128xf32>
    %59 = arith.addf %0, %58 : vector<8x128xf32>
    %c1_i32 = arith.constant 1 : i32
    %c1_i32_10 = arith.constant 1 : i32
    %c0_11 = arith.constant 0 : index
    %c0_12 = arith.constant 0 : index
    %c0_13 = arith.constant 0 : index
    %c0_14 = arith.constant 0 : index
    %60 = vector.load %arg6[%c0_11, %c0_12, %c0_13, %c0_14] : memref<1x1x8x128xf32, #tpu.memory_space<vmem>>, vector<1x1x8x128xf32>
    %61 = vector.shape_cast %60 : vector<1x1x8x128xf32> to vector<8x128xf32>
    %62 = vector.shape_cast %59 : vector<8x128xf32> to vector<1x1x8x128xf32>
    tpu.vector_store %arg6[%c0_11, %c0_12, %c0_13, %c0_14], %62 {strides = array<i32>} : memref<1x1x8x128xf32, #tpu.memory_space<vmem>>, vector<1x1x8x128xf32>,
    return
  }
  func.func @transform_0(%arg0: i32, %arg1: i32) -> (i32, i32, i32) {
    %c0_i32 = arith.constant 0 : i32
    %c0_i32_0 = arith.constant 0 : i32
    %c0_i32_1 = arith.constant 0 : i32
    return %arg0, %c0_i32, %c0_i32_0 : i32, i32, i32
  }
  func.func @transform_1(%arg0: i32, %arg1: i32) -> (i32, i32, i32) {
    %c0_i32 = arith.constant 0 : i32
    %c0_i32_0 = arith.constant 0 : i32
    %c0_i32_1 = arith.constant 0 : i32
    return %arg0, %c0_i32, %c0_i32_0 : i32, i32, i32
  }
  func.func @transform_2(%arg0: i32, %arg1: i32) -> (i32, i32, i32) {
    %c0_i32 = arith.constant 0 : i32
    %c0_i32_0 = arith.constant 0 : i32
    return %arg0, %arg1, %c0_i32 : i32, i32, i32
  }
  func.func @transform_3(%arg0: i32, %arg1: i32) -> (i32, i32, i32) {
    %c0_i32 = arith.constant 0 : i32
    %c0_i32_0 = arith.constant 0 : i32
    return %arg0, %arg1, %c0_i32 : i32, i32, i32
  }
  func.func @transform_4(%arg0: i32, %arg1: i32) -> (i32, i32, i32, i32) {
    %c0_i32 = arith.constant 0 : i32
    %c0_i32_0 = arith.constant 0 : i32
    %c0_i32_1 = arith.constant 0 : i32
    return %arg0, %arg1, %c0_i32, %c0_i32_0 : i32, i32, i32, i32
  }
}

</mosaic_0001>

<llo_original>
// kernel: tpu_custom_call.1
$region0: #{tpu_custom_call.1}
  #allocation0 [shape = 'u32[]', space=smem, size = 0x4, offset = 0x4, fixed_abs, tag = 'smem constant byte address 0x4 - core index']
  #allocation1 [shape = 'u32[144,128]{1,0:T(1,128)}', space=vmem, size = 0x12000, scoped, tag = 'internal scratch']
  %s0 = inlined_call_operand.vmem [shape: f32[2,1,128], index: 0, kind: input, shape index: {}]
  %s1 = inlined_call_operand.vmem [shape: f32[2,1,128], index: 1, kind: input, shape index: {}]
  %s2 = inlined_call_operand.vmem [shape: f32[2,128,1], index: 2, kind: input, shape index: {}]
  %s3 = inlined_call_operand.vmem [shape: f32[2,128,1], index: 3, kind: input, shape index: {}]
  %s4 = inlined_call_operand.hbm [shape: f32[2,1,8,128], index: 4, kind: output, shape index: {}]
  %s5 = sld [smem:[#allocation0]]
  $region49: #{tpu_custom_call.1} parent=0
    _
  %s7 = ssub.s32 1, %s5
  %s8 = scalar_select 0, %s7, %s5
  $region1: #{tpu_custom_call.1} parent=0
    #allocation2 [shape = 'u8[8192]{0}', space=vmem, size = 0x2000, scoped, tag = 'output window, operand 0']
    #allocation3 [shape = 's32[2]{0}', space=sflag, size = 0x8, scoped, tag = 'scoped memory for tpu_custom_call.1']
    %9 = vsyncpa [#allocation3], 0
    %s10 = scalar_lea.sflag [#allocation3], 1
    %11 = vsyncpa %s10, 0
    loop: start=0, step=1, limit=4
    $region2: #{tpu_custom_call.1} parent=1 // loop_pre_header
      _
    $region3: #{tpu_custom_call.1} parent=1 // loop_header
      %s13 = sphi 0, %s17
      %p14 = scmp.ge.s32.totalorder %s13, 4
      %s20 = sphi 0, %s32
      %s21 = sphi 0, %s28
      %s22 = sphi 0, %s20
      %s23 = sphi 0, %s21
      %s24 = sphi 0, %s22
      %s25 = sphi 0, %s23
      %s35 = sphi 0, %s37
      %s38 = sphi 0, %s35
      %s39 = sphi 0, %s38
      %s55 = sphi 0, %s39
      %s61 = sphi 0, %s63
      %s64 = sphi 0, %s61
      %s65 = sphi 0, %s64
      %s81 = sphi 0, %s65
      %s89 = sphi 0, %s91
      %s92 = sphi 0, %s89
      %s93 = sphi 0, %s92
      %s109 = sphi 0, %s93
      %s117 = sphi 0, %s119
      %s120 = sphi 0, %s117
      %s121 = sphi 0, %s120
      %s137 = sphi 0, %s121
      %s145 = sphi 0, %s147
      %s148 = sphi 0, %s145
      %s149 = sphi 0, %s148
      %s165 = sphi 0, %s149
    $region4: #{tpu_custom_call.1} parent=1 // loop_header_branch
      %16 = sbr.rel (%p14) target = $region8
    $region5: #{tpu_custom_call.1} parent=1 // loop_body
      %s18 = ssub.s32 %s13, 1
      %s19 = ssub.s32 %s13, 2
      %s26 = sadd.s32 1, %s21
      %p27 = scmp.ge.s32.totalorder %s26, 1
      %s28 = scalar_select %p27, 0, %s26
      %s29 = sadd.s32 1, %s20
      %s30 = scalar_select %p27, %s29, %s20
      %p31 = scmp.ge.s32.totalorder %s30, 2
      %s32 = scalar_select %p31, 0, %s30
      %s33 = ssub.s32 %s20, %s32
      %p34 = scmp.eq.s32.totalorder %s33, 0
      %s36 = sadd.s32 %s35, 1
      %s37 = scalar_select %p34, %s35, %s36
      %p40 = pneg %p34
      %p41 = scmp.eq.s32.totalorder %s13, 1
      %p42 = por %p40, %p41
      %p43 = scmp.ne.s32.totalorder %s35, %s38
      %p44 = scmp.eq.s32.totalorder %s13, 0
      %p45 = por %p43, %p44
      %p46 = scmp.ne.s32.totalorder %s35, %s38
      %p47 = scmp.eq.s32.totalorder %s18, 1
      %p48 = por %p46, %p47
      %p49 = scmp.ne.s32.totalorder %s38, %s39
      %p50 = scmp.eq.s32.totalorder %s18, 0
      %p51 = por %p49, %p50
      %p52 = scmp.ne.s32.totalorder %s38, %s39
      %p53 = scmp.eq.s32.totalorder %s19, 1
      %p54 = por %p52, %p53
      %p56 = scmp.ne.s32.totalorder %s39, %s55
      %p57 = scmp.eq.s32.totalorder %s19, 0
      %p58 = por %p56, %p57
      %s59 = ssub.s32 %s20, %s32
      %p60 = scmp.eq.s32.totalorder %s59, 0
      %s62 = sadd.s32 %s61, 1
      %s63 = scalar_select %p60, %s61, %s62
      %p66 = pneg %p60
      %p67 = scmp.eq.s32.totalorder %s13, 1
      %p68 = por %p66, %p67
      %p69 = scmp.ne.s32.totalorder %s61, %s64
      %p70 = scmp.eq.s32.totalorder %s13, 0
      %p71 = por %p69, %p70
      %p72 = scmp.ne.s32.totalorder %s61, %s64
      %p73 = scmp.eq.s32.totalorder %s18, 1
      %p74 = por %p72, %p73
      %p75 = scmp.ne.s32.totalorder %s64, %s65
      %p76 = scmp.eq.s32.totalorder %s18, 0
      %p77 = por %p75, %p76
      %p78 = scmp.ne.s32.totalorder %s64, %s65
      %p79 = scmp.eq.s32.totalorder %s19, 1
      %p80 = por %p78, %p79
      %p82 = scmp.ne.s32.totalorder %s65, %s81
      %p83 = scmp.eq.s32.totalorder %s19, 0
      %p84 = por %p82, %p83
      %s85 = ssub.s32 %s20, %s32
      %s86 = ssub.s32 %s21, %s28
      %s87 = sor.u32 %s85, %s86
      %p88 = scmp.eq.s32.totalorder %s87, 0
      %s90 = sadd.s32 %s89, 1
      %s91 = scalar_select %p88, %s89, %s90
      %p94 = pneg %p88
      %p95 = scmp.eq.s32.totalorder %s13, 1
      %p96 = por %p94, %p95
      %p97 = scmp.ne.s32.totalorder %s89, %s92
      %p98 = scmp.eq.s32.totalorder %s13, 0
      %p99 = por %p97, %p98
      %p100 = scmp.ne.s32.totalorder %s89, %s92
      %p101 = scmp.eq.s32.totalorder %s18, 1
      %p102 = por %p100, %p101
      %p103 = scmp.ne.s32.totalorder %s92, %s93
      %p104 = scmp.eq.s32.totalorder %s18, 0
      %p105 = por %p103, %p104
      %p106 = scmp.ne.s32.totalorder %s92, %s93
      %p107 = scmp.eq.s32.totalorder %s19, 1
      %p108 = por %p106, %p107
      %p110 = scmp.ne.s32.totalorder %s93, %s109
      %p111 = scmp.eq.s32.totalorder %s19, 0
      %p112 = por %p110, %p111
      %s113 = ssub.s32 %s20, %s32
      %s114 = ssub.s32 %s21, %s28
      %s115 = sor.u32 %s113, %s114
      %p116 = scmp.eq.s32.totalorder %s115, 0
      %s118 = sadd.s32 %s117, 1
      %s119 = scalar_select %p116, %s117, %s118
      %p122 = pneg %p116
      %p123 = scmp.eq.s32.totalorder %s13, 1
      %p124 = por %p122, %p123
      %p125 = scmp.ne.s32.totalorder %s117, %s120
      %p126 = scmp.eq.s32.totalorder %s13, 0
      %p127 = por %p125, %p126
      %p128 = scmp.ne.s32.totalorder %s117, %s120
      %p129 = scmp.eq.s32.totalorder %s18, 1
      %p130 = por %p128, %p129
      %p131 = scmp.ne.s32.totalorder %s120, %s121
      %p132 = scmp.eq.s32.totalorder %s18, 0
      %p133 = por %p131, %p132
      %p134 = scmp.ne.s32.totalorder %s120, %s121
      %p135 = scmp.eq.s32.totalorder %s19, 1
      %p136 = por %p134, %p135
      %p138 = scmp.ne.s32.totalorder %s121, %s137
      %p139 = scmp.eq.s32.totalorder %s19, 0
      %p140 = por %p138, %p139
      %s141 = ssub.s32 %s20, %s32
      %s142 = ssub.s32 %s21, %s28
      %s143 = sor.u32 %s141, %s142
      %p144 = scmp.eq.s32.totalorder %s143, 0
      %s146 = sadd.s32 %s145, 1
      %s147 = scalar_select %p144, %s145, %s146
      %p150 = pneg %p144
      %p151 = scmp.eq.s32.totalorder %s13, 1
      %p152 = por %p150, %p151
      %p153 = scmp.ne.s32.totalorder %s145, %s148
      %p154 = scmp.eq.s32.totalorder %s13, 0
      %p155 = por %p153, %p154
      %p156 = scmp.ne.s32.totalorder %s145, %s148
      %p157 = scmp.eq.s32.totalorder %s18, 1
      %p158 = por %p156, %p157
      %p159 = scmp.ne.s32.totalorder %s148, %s149
      %p160 = scmp.eq.s32.totalorder %s18, 0
      %p161 = por %p159, %p160
      %p162 = scmp.ne.s32.totalorder %s148, %s149
      %p163 = scmp.eq.s32.totalorder %s19, 1
      %p164 = por %p162, %p163
      %p166 = scmp.ne.s32.totalorder %s149, %s165
      %p167 = scmp.eq.s32.totalorder %s19, 0
      %p168 = por %p166, %p167
      %p169 = scmp.le.s32.totalorder 1, %s13
      %p170 = scmp.lt.s32.totalorder %s13, 3
      %p171 = pnand %p169, %p170
      %p172 = pneg %p171
      // Predicated region
      $region9: #{tpu_custom_call.1} parent=5 // pred_check
        _
      $region10: #{tpu_custom_call.1} parent=5 // pred_check_branch
        %174 = sbr.rel (%p171) target = $region12
      $region11: #{tpu_custom_call.1} parent=5 // pred_region
        %s175 = ssub.s32 %s13, 1
      $region12: #{tpu_custom_call.1} parent=5 // pred_fallthru
        _
      %p176 = scmp.lt.s32.totalorder %s13, 2
      // Predicated region
      $region13: #{tpu_custom_call.1} parent=5 // pred_check
        %p177 = pneg %p176
      $region14: #{tpu_custom_call.1} parent=5 // pred_check_branch
        %179 = sbr.rel (%p177) target = $region16
      $region15: #{tpu_custom_call.1} parent=5 // pred_region
        // Predicated region
        $region17: #{tpu_custom_call.1} parent=15 // pred_check
          %p180 = pneg %p45
        $region18: #{tpu_custom_call.1} parent=15 // pred_check_branch
          %182 = sbr.rel (%p180) target = $region20
        $region19: #{tpu_custom_call.1} parent=15 // pred_region
          %p183 = scmp.lt.s32.totalorder %s20, 1
          %s184 = scalar_select %p183, %s20, 1
          %s185 = scalar_lea.vmem %s0, %s184
        $region20: #{tpu_custom_call.1} parent=15 // pred_fallthru
          _
        // Predicated region
        $region21: #{tpu_custom_call.1} parent=15 // pred_check
          %p186 = pneg %p71
        $region22: #{tpu_custom_call.1} parent=15 // pred_check_branch
          %188 = sbr.rel (%p186) target = $region24
        $region23: #{tpu_custom_call.1} parent=15 // pred_region
          %p189 = scmp.lt.s32.totalorder %s20, 1
          %s190 = scalar_select %p189, %s20, 1
          %s191 = scalar_lea.vmem %s1, %s190
        $region24: #{tpu_custom_call.1} parent=15 // pred_fallthru
          _
        // Predicated region
        $region25: #{tpu_custom_call.1} parent=15 // pred_check
          %p192 = pneg %p99
        $region26: #{tpu_custom_call.1} parent=15 // pred_check_branch
          %194 = sbr.rel (%p192) target = $region28
        $region27: #{tpu_custom_call.1} parent=15 // pred_region
          %s195 = smul.u32 16, %s21
          %p196 = scmp.lt.s32.totalorder %s20, 1
          %s197 = scalar_select %p196, %s20, 1
          %p198 = scmp.lt.s32.totalorder %s195, 15
          %s199 = scalar_select %p198, %s195, 15
          %s200 = smul.addr %s197, 16
          %s201 = sadd.s32 %s199, %s200
          %s202 = smul.addr %s201, 8
          %s203 = scalar_lea.vmem %s2, %s202
          %s204 = smul.u32 16, %s21
        $region28: #{tpu_custom_call.1} parent=15 // pred_fallthru
          _
        // Predicated region
        $region29: #{tpu_custom_call.1} parent=15 // pred_check
          %p205 = pneg %p127
        $region30: #{tpu_custom_call.1} parent=15 // pred_check_branch
          %207 = sbr.rel (%p205) target = $region32
        $region31: #{tpu_custom_call.1} parent=15 // pred_region
          %s208 = smul.u32 16, %s21
          %p209 = scmp.lt.s32.totalorder %s20, 1
          %s210 = scalar_select %p209, %s20, 1
          %p211 = scmp.lt.s32.totalorder %s208, 15
          %s212 = scalar_select %p211, %s208, 15
          %s213 = smul.addr %s210, 16
          %s214 = sadd.s32 %s212, %s213
          %s215 = smul.addr %s214, 8
          %s216 = scalar_lea.vmem %s3, %s215
          %s217 = smul.u32 16, %s21
        $region32: #{tpu_custom_call.1} parent=15 // pred_fallthru
          _
      $region16: #{tpu_custom_call.1} parent=5 // pred_fallthru
        _
      %p218 = scmp.le.s32.totalorder 1, %s13
      %p219 = scmp.lt.s32.totalorder %s13, 3
      %p220 = pnand %p218, %p219
      %p221 = pneg %p220
      // Predicated region
      $region33: #{tpu_custom_call.1} parent=5 // pred_check
        _
      $region34: #{tpu_custom_call.1} parent=5 // pred_check_branch
        %223 = sbr.rel (%p220) target = $region36
      $region35: #{tpu_custom_call.1} parent=5 // pred_region
        %s224 = ssub.s32 %s13, 1
        %p225 = scmp.lt.s32.totalorder %s22, 1
        %s226 = scalar_select %p225, %s22, 1
        %s227 = scalar_lea.vmem %s0, %s226
        %p228 = pneg %p51
        %p229 = pneg %p48
        %p230 = scmp.lt.s32.totalorder %s22, 1
        %s231 = scalar_select %p230, %s22, 1
        %s232 = scalar_lea.vmem %s1, %s231
        %p233 = pneg %p77
        %p234 = pneg %p74
        %s235 = smul.u32 16, %s23
        %p236 = scmp.lt.s32.totalorder %s22, 1
        %s237 = scalar_select %p236, %s22, 1
        %p238 = scmp.lt.s32.totalorder %s235, 15
        %s239 = scalar_select %p238, %s235, 15
        %s240 = smul.addr %s237, 16
        %s241 = sadd.s32 %s239, %s240
        %s242 = smul.addr %s241, 8
        %s243 = scalar_lea.vmem %s2, %s242
        %p244 = pneg %p105
        %p245 = pneg %p102
        %s246 = smul.u32 16, %s23
        %p247 = scmp.lt.s32.totalorder %s22, 1
        %s248 = scalar_select %p247, %s22, 1
        %p249 = scmp.lt.s32.totalorder %s246, 15
        %s250 = scalar_select %p249, %s246, 15
        %s251 = smul.addr %s248, 16
        %s252 = sadd.s32 %s250, %s251
        %s253 = smul.addr %s252, 8
        %s254 = scalar_lea.vmem %s3, %s253
        %p255 = pneg %p133
        %p256 = pneg %p130
        %p257 = pneg %p161
        %p258 = pneg %p158
        %s259 = sand.u32 %s148, 1
        %s260 = scalar_lea.sflag [#allocation3], %s259
        %s261 = sand.u32 %s148, 1
        %s262 = smul.addr %s261, 8
        %s263 = scalar_lea.vmem [#allocation2], %s262
        %p264 = scmp.lt.s32.totalorder %s22, 1
        %s265 = scalar_select %p264, %s22, 1
        %s266 = scalar_lea.vmem %s0, %s265
        %p267 = scmp.lt.s32.totalorder %s22, 1
        %s268 = scalar_select %p267, %s22, 1
        %s269 = scalar_lea.vmem %s1, %s268
        %s270 = smul.u32 16, %s23
        %p271 = scmp.lt.s32.totalorder %s22, 1
        %s272 = scalar_select %p271, %s22, 1
        %p273 = scmp.lt.s32.totalorder %s270, 15
        %s274 = scalar_select %p273, %s270, 15
        %s275 = smul.addr %s272, 16
        %s276 = sadd.s32 %s274, %s275
        %s277 = smul.addr %s276, 8
        %s278 = scalar_lea.vmem %s2, %s277
        %s279 = smul.u32 16, %s23
        %s280 = smul.u32 16, %s23
        %p281 = scmp.lt.s32.totalorder %s22, 1
        %s282 = scalar_select %p281, %s22, 1
        %p283 = scmp.lt.s32.totalorder %s280, 15
        %s284 = scalar_select %p283, %s280, 15
        %s285 = smul.addr %s282, 16
        %s286 = sadd.s32 %s284, %s285
        %s287 = smul.addr %s286, 8
        %s288 = scalar_lea.vmem %s3, %s287
        %s289 = smul.u32 16, %s23
        %v290 = vld [vmem:[%s278] sm:$0xff]
        %v291 = vld [vmem:[%s278 + $0x8] sm:$0xff]
        %v292 = vld [vmem:[%s278 + $0x10] sm:$0xff]
        %v293 = vld [vmem:[%s278 + $0x18] sm:$0xff]
        %v294 = vld [vmem:[%s278 + $0x20] sm:$0xff]
        %v295 = vld [vmem:[%s278 + $0x28] sm:$0xff]
        %v296 = vld [vmem:[%s278 + $0x30] sm:$0xff]
        %v297 = vld [vmem:[%s278 + $0x38] sm:$0xff]
        %v298 = vld [vmem:[%s278 + $0x40] sm:$0xff]
        %v299 = vld [vmem:[%s278 + $0x48] sm:$0xff]
        %v300 = vld [vmem:[%s278 + $0x50] sm:$0xff]
        %v301 = vld [vmem:[%s278 + $0x58] sm:$0xff]
        %v302 = vld [vmem:[%s278 + $0x60] sm:$0xff]
        %v303 = vld [vmem:[%s278 + $0x68] sm:$0xff]
        %v304 = vld [vmem:[%s278 + $0x70] sm:$0xff]
        %v305 = vld [vmem:[%s278 + $0x78] sm:$0xff]
        %v306 = vld [vmem:[%s288] sm:$0xff]
        %v307 = vld [vmem:[%s288 + $0x8] sm:$0xff]
        %v308 = vld [vmem:[%s288 + $0x10] sm:$0xff]
        %v309 = vld [vmem:[%s288 + $0x18] sm:$0xff]
        %v310 = vld [vmem:[%s288 + $0x20] sm:$0xff]
        %v311 = vld [vmem:[%s288 + $0x28] sm:$0xff]
        %v312 = vld [vmem:[%s288 + $0x30] sm:$0xff]
        %v313 = vld [vmem:[%s288 + $0x38] sm:$0xff]
        %v314 = vld [vmem:[%s288 + $0x40] sm:$0xff]
        %v315 = vld [vmem:[%s288 + $0x48] sm:$0xff]
        %v316 = vld [vmem:[%s288 + $0x50] sm:$0xff]
        %v317 = vld [vmem:[%s288 + $0x58] sm:$0xff]
        %v318 = vld [vmem:[%s288 + $0x60] sm:$0xff]
        %v319 = vld [vmem:[%s288 + $0x68] sm:$0xff]
        %v320 = vld [vmem:[%s288 + $0x70] sm:$0xff]
        %v321 = vld [vmem:[%s288 + $0x78] sm:$0xff]
        %323 = vset.pattern.permute.xlu0 0
        %324 = vperm.xlu0 %323, %v290
        %v325 = vpop.permute.xlu0 %324
        %328 = vset.pattern.permute.xlu0 0
        %329 = vperm.xlu0 %328, %v291
        %v330 = vpop.permute.xlu0 %329
        %333 = vset.pattern.permute.xlu0 0
        %334 = vperm.xlu0 %333, %v292
        %v335 = vpop.permute.xlu0 %334
        %338 = vset.pattern.permute.xlu0 0
        %339 = vperm.xlu0 %338, %v293
        %v340 = vpop.permute.xlu0 %339
        %343 = vset.pattern.permute.xlu0 0
        %344 = vperm.xlu0 %343, %v294
        %v345 = vpop.permute.xlu0 %344
        %348 = vset.pattern.permute.xlu0 0
        %349 = vperm.xlu0 %348, %v295
        %v350 = vpop.permute.xlu0 %349
        %353 = vset.pattern.permute.xlu0 0
        %354 = vperm.xlu0 %353, %v296
        %v355 = vpop.permute.xlu0 %354
        %358 = vset.pattern.permute.xlu0 0
        %359 = vperm.xlu0 %358, %v297
        %v360 = vpop.permute.xlu0 %359
        %363 = vset.pattern.permute.xlu0 0
        %364 = vperm.xlu0 %363, %v298
        %v365 = vpop.permute.xlu0 %364
        %368 = vset.pattern.permute.xlu0 0
        %369 = vperm.xlu0 %368, %v299
        %v370 = vpop.permute.xlu0 %369
        %373 = vset.pattern.permute.xlu0 0
        %374 = vperm.xlu0 %373, %v300
        %v375 = vpop.permute.xlu0 %374
        %378 = vset.pattern.permute.xlu0 0
        %379 = vperm.xlu0 %378, %v301
        %v380 = vpop.permute.xlu0 %379
        %383 = vset.pattern.permute.xlu0 0
        %384 = vperm.xlu0 %383, %v302
        %v385 = vpop.permute.xlu0 %384
        %388 = vset.pattern.permute.xlu0 0
        %389 = vperm.xlu0 %388, %v303
        %v390 = vpop.permute.xlu0 %389
        %393 = vset.pattern.permute.xlu0 0
        %394 = vperm.xlu0 %393, %v304
        %v395 = vpop.permute.xlu0 %394
        %398 = vset.pattern.permute.xlu0 0
        %399 = vperm.xlu0 %398, %v305
        %v400 = vpop.permute.xlu0 %399
        %403 = vset.pattern.permute.xlu0 0
        %404 = vperm.xlu0 %403, %v306
        %v405 = vpop.permute.xlu0 %404
        %408 = vset.pattern.permute.xlu0 0
        %409 = vperm.xlu0 %408, %v307
        %v410 = vpop.permute.xlu0 %409
        %413 = vset.pattern.permute.xlu0 0
        %414 = vperm.xlu0 %413, %v308
        %v415 = vpop.permute.xlu0 %414
        %418 = vset.pattern.permute.xlu0 0
        %419 = vperm.xlu0 %418, %v309
        %v420 = vpop.permute.xlu0 %419
        %423 = vset.pattern.permute.xlu0 0
        %424 = vperm.xlu0 %423, %v310
        %v425 = vpop.permute.xlu0 %424
        %428 = vset.pattern.permute.xlu0 0
        %429 = vperm.xlu0 %428, %v311
        %v430 = vpop.permute.xlu0 %429
        %433 = vset.pattern.permute.xlu0 0
        %434 = vperm.xlu0 %433, %v312
        %v435 = vpop.permute.xlu0 %434
        %438 = vset.pattern.permute.xlu0 0
        %439 = vperm.xlu0 %438, %v313
        %v440 = vpop.permute.xlu0 %439
        %443 = vset.pattern.permute.xlu0 0
        %444 = vperm.xlu0 %443, %v314
        %v445 = vpop.permute.xlu0 %444
        %448 = vset.pattern.permute.xlu0 0
        %449 = vperm.xlu0 %448, %v315
        %v450 = vpop.permute.xlu0 %449
        %453 = vset.pattern.permute.xlu0 0
        %454 = vperm.xlu0 %453, %v316
        %v455 = vpop.permute.xlu0 %454
        %458 = vset.pattern.permute.xlu0 0
        %459 = vperm.xlu0 %458, %v317
        %v460 = vpop.permute.xlu0 %459
        %463 = vset.pattern.permute.xlu0 0
        %464 = vperm.xlu0 %463, %v318
        %v465 = vpop.permute.xlu0 %464
        %468 = vset.pattern.permute.xlu0 0
        %469 = vperm.xlu0 %468, %v319
        %v470 = vpop.permute.xlu0 %469
        %473 = vset.pattern.permute.xlu0 0
        %474 = vperm.xlu0 %473, %v320
        %v475 = vpop.permute.xlu0 %474
        %478 = vset.pattern.permute.xlu0 0
        %479 = vperm.xlu0 %478, %v321
        %v480 = vpop.permute.xlu0 %479
        %v482 = vld [vmem:[%s266] sm:$0x1]
        %v483 = vld [vmem:[%s269] sm:$0x1]
        %v485 = vlaneseq
        %v486 = vshrl.u32 %v485, 7
        %v487 = vsub.s32 0, %v486
        %v488 = vrot.slane %v482, %v487
        %v490 = vsub.f32 %v325, %v488
        %v491 = vsub.f32 %v330, %v488
        %v492 = vsub.f32 %v335, %v488
        %v493 = vsub.f32 %v340, %v488
        %v494 = vsub.f32 %v345, %v488
        %v495 = vsub.f32 %v350, %v488
        %v496 = vsub.f32 %v355, %v488
        %v497 = vsub.f32 %v360, %v488
        %v498 = vsub.f32 %v365, %v488
        %v499 = vsub.f32 %v370, %v488
        %v500 = vsub.f32 %v375, %v488
        %v501 = vsub.f32 %v380, %v488
        %v502 = vsub.f32 %v385, %v488
        %v503 = vsub.f32 %v390, %v488
        %v504 = vsub.f32 %v395, %v488
        %v505 = vsub.f32 %v400, %v488
        %v507 = vlaneseq
        %v508 = vshrl.u32 %v507, 7
        %v509 = vsub.s32 0, %v508
        %v510 = vrot.slane %v483, %v509
        %v512 = vsub.f32 %v510, %v405
        %v513 = vsub.f32 %v510, %v410
        %v514 = vsub.f32 %v510, %v415
        %v515 = vsub.f32 %v510, %v420
        %v516 = vsub.f32 %v510, %v425
        %v517 = vsub.f32 %v510, %v430
        %v518 = vsub.f32 %v510, %v435
        %v519 = vsub.f32 %v510, %v440
        %v520 = vsub.f32 %v510, %v445
        %v521 = vsub.f32 %v510, %v450
        %v522 = vsub.f32 %v510, %v455
        %v523 = vsub.f32 %v510, %v460
        %v524 = vsub.f32 %v510, %v465
        %v525 = vsub.f32 %v510, %v470
        %v526 = vsub.f32 %v510, %v475
        %v527 = vsub.f32 %v510, %v480
        %v528 = vmul.f32 %v490, %v512
        %v529 = vmul.f32 %v491, %v513
        %v530 = vmul.f32 %v492, %v514
        %v531 = vmul.f32 %v493, %v515
        %v532 = vmul.f32 %v494, %v516
        %v533 = vmul.f32 %v495, %v517
        %v534 = vmul.f32 %v496, %v518
        %v535 = vmul.f32 %v497, %v519
        %v536 = vmul.f32 %v498, %v520
        %v537 = vmul.f32 %v499, %v521
        %v538 = vmul.f32 %v500, %v522
        %v539 = vmul.f32 %v501, %v523
        %v540 = vmul.f32 %v502, %v524
        %v541 = vmul.f32 %v503, %v525
        %v542 = vmul.f32 %v504, %v526
        %v543 = vmul.f32 %v505, %v527
        %v544 = vmax.f32 %v528, 0.0
        %v545 = vmax.f32 %v529, 0.0
        %v546 = vmax.f32 %v530, 0.0
        %v547 = vmax.f32 %v531, 0.0
        %v548 = vmax.f32 %v532, 0.0
        %v549 = vmax.f32 %v533, 0.0
        %v550 = vmax.f32 %v534, 0.0
        %v551 = vmax.f32 %v535, 0.0
        %v552 = vmax.f32 %v536, 0.0
        %v553 = vmax.f32 %v537, 0.0
        %v554 = vmax.f32 %v538, 0.0
        %v555 = vmax.f32 %v539, 0.0
        %v556 = vmax.f32 %v540, 0.0
        %v557 = vmax.f32 %v541, 0.0
        %v558 = vmax.f32 %v542, 0.0
        %v559 = vmax.f32 %v543, 0.0
        %v560 = vadd.f32 %v544, %v545
        %v561 = vadd.f32 %v560, %v546
        %v562 = vadd.f32 %v561, %v547
        %v563 = vadd.f32 %v562, %v548
        %v564 = vadd.f32 %v563, %v549
        %v565 = vadd.f32 %v564, %v550
        %v566 = vadd.f32 %v565, %v551
        %v567 = vadd.f32 %v566, %v552
        %v568 = vadd.f32 %v567, %v553
        %v569 = vadd.f32 %v568, %v554
        %v570 = vadd.f32 %v569, %v555
        %v571 = vadd.f32 %v570, %v556
        %v572 = vadd.f32 %v571, %v557
        %v573 = vadd.f32 %v572, %v558
        %v574 = vadd.f32 %v573, %v559
        %v575 = vadd.f32 %v574, 0.0
        %576 = vst [vmem:[%s263] sm:$0xff] %v575
        %s577 = sand.u32 %s148, 1
        %s578 = scalar_lea.sflag [#allocation3], %s577
        %s579 = sand.u32 %s148, 1
        %s580 = smul.addr %s579, 8
        %s581 = scalar_lea.vmem [#allocation2], %s580
        // Predicated region
        $region37: #{tpu_custom_call.1} parent=35 // pred_check
          %p582 = pneg %p158
        $region38: #{tpu_custom_call.1} parent=35 // pred_check_branch
          %584 = sbr.rel (%p582) target = $region40
        $region39: #{tpu_custom_call.1} parent=35 // pred_region
          %s586 = ssub.s32 128, 128
          %587 = vsyncadd %s578, %s586
          %s588 = sadd.s32 %s23, %s22
          %s589 = smul.addr %s588, 128
          %s590 = scalar_lea.hbm %s4, %s589
          %s592 = sshll.u32 %s581, 4
          %s593 = int_to_ptr.vmem [resolvable:$true] %s592
          %595 = dma.vmem_to_hbm [thread:$0]  %s593, 128, %s590, %s578
        $region40: #{tpu_custom_call.1} parent=35 // pred_fallthru
          _
      $region36: #{tpu_custom_call.1} parent=5 // pred_fallthru
        _
      %p596 = scmp.le.s32.totalorder 2, %s13
      // Predicated region
      $region41: #{tpu_custom_call.1} parent=5 // pred_check
        %p597 = pneg %p596
      $region42: #{tpu_custom_call.1} parent=5 // pred_check_branch
        %599 = sbr.rel (%p597) target = $region44
      $region43: #{tpu_custom_call.1} parent=5 // pred_region
        %s600 = ssub.s32 %s13, 2
        // Predicated region
        $region45: #{tpu_custom_call.1} parent=43 // pred_check
          %p601 = pneg %p164
        $region46: #{tpu_custom_call.1} parent=43 // pred_check_branch
          %603 = sbr.rel (%p601) target = $region48
        $region47: #{tpu_custom_call.1} parent=43 // pred_region
          %s604 = sand.u32 %s149, 1
          %s605 = scalar_lea.sflag [#allocation3], %s604
          %s606 = sand.u32 %s149, 1
          %s607 = smul.addr %s606, 8
          %s608 = scalar_lea.vmem [#allocation2], %s607
          %609 = dma.done %s605, 128
        $region48: #{tpu_custom_call.1} parent=43 // pred_fallthru
          _
      $region44: #{tpu_custom_call.1} parent=5 // pred_fallthru
        _
    $region6: #{tpu_custom_call.1} parent=1 // loop_footer
      %s17 = sadd.s32 1, %s13
    $region7: #{tpu_custom_call.1} parent=1 // loop_footer_branch
      %12 = sbr.rel target = $region3
    $region8: #{tpu_custom_call.1} parent=1 // loop_exit
      _
    %610 = vsyncpa [#allocation3], 1
    %s611 = scalar_lea.sflag [#allocation3], 1
    %612 = vsyncpa %s611, 1

</llo_original>
